<compile_context>
chip_gen: v7x
topology: tpu7x:2x2x1
jax: 0.10.0
libtpu: 0.0.40
codegen_flags: <defaults>
</compile_context>

<pallas_src>
import functools

import jax
import jax.numpy as jnp
from jax.experimental import pallas as pl
from jax.experimental.pallas import tpu as pltpu


def get_w(channels: int, sigma: float) -> jnp.ndarray:
    """Gaussian lateral weight matrix, identical to stellate.get_w."""
    x = jnp.linspace(0.0, channels - 1, channels)                    # (C,)
    centers = jnp.arange(channels, dtype=jnp.float32)[:, None]       # (C, 1)
    w = jnp.exp(-0.5 * ((x[None, :] - centers) / sigma) ** 2) / (
        sigma * jnp.sqrt(2.0 * jnp.pi)
    )
    return w.astype(jnp.float32)                                     # (C, C)


def _make_leaky_kernel(beta: float, thr: float, bb: int, tt: int, C: int,
                       unroll: int, fused_reshape: bool):
    # Plain Python floats -> lowered as literals (no captured jax-array consts).
    beta = float(beta)
    thr = float(thr)

    def kernel(wt_ref, x_ref, spk_ref, buf_ref, mem_ref):
        # wt_ref:  (C, C)      = (I - w).T, resident (constant block index)
        # x_ref:   (bb, tt, C) raw input tile
        # spk_ref: (bb, tt, C) output tile (possibly narrow dtype)
        # buf_ref: (bb, tt, C) f32 staging scratch (eff. input, then spikes)
        # mem_ref: (bb, C)     f32 membrane state carried across time tiles
        #
        # Time (axis 1 of the grid) is the innermost grid axis, so program_id(1)
        # returns to 0 exactly when a new batch shard starts -> re-init mem.
        @pl.when(pl.program_id(1) == 0)
        def _():
            mem_ref[...] = jnp.zeros_like(mem_ref)

        if fused_reshape:
            # Fused lateral inhibition: one MXU matmul for the whole tile.
            # (bb, tt, C) -> (bb*tt, C) is layout-free because tt % 8 == 0.
            x2d = x_ref[...].reshape(bb * tt, C)
            buf_ref[...] = jnp.dot(
                x2d, wt_ref[...], preferred_element_type=jnp.float32
            ).reshape(bb, tt, C)

        def step(i, mem):
            if fused_reshape:
                x_t = buf_ref[:, i, :]                       # (bb, C), eff. input
            else:
                # Tiny / non-multiple-of-8 time tiles: per-step matmul fallback.
                x_t = jnp.dot(x_ref[:, i, :], wt_ref[...],
                              preferred_element_type=jnp.float32)
            # reset-by-subtraction uses the *previous* membrane potential
            reset = jnp.where(mem > thr, thr, 0.0)
            mem_new = beta * mem + x_t - reset
            # Stage spikes in f32 scratch (overwrites the consumed input slot);
            # a single dense, dtype-narrowed store happens after the loop.
            buf_ref[:, i, :] = (mem_new > thr).astype(jnp.float32)
            return mem_new

        # Membrane carried in vregs through the (partially unrolled) serial
        # loop; spilled back to scratch only once per time tile.
        mem_ref[...] = jax.lax.fori_loop(0, tt, step, mem_ref[...],
                                         unroll=unroll)

        # One dense tile-wide store (and dtype narrowing) to the output block.
        spk_ref[...] = buf_ref[...].astype(spk_ref.dtype)

    return kernel


@functools.partial(
    jax.jit,
    static_argnames=("beta", "thr", "batch_shards", "out_dtype", "tt_cap"))
def stellate_forward(inp, w, *, beta: float = 0.95, thr: float = 0.8,
                     batch_shards=None, out_dtype=jnp.bfloat16, tt_cap: int = 512):
    """inp: (B, T, C) float; w: (C, C) float. Returns spikes (B, T, C)."""
    B, T, C = inp.shape
    x = inp.astype(jnp.float32)                       # no-op for f32 callers
    # Fused weight:  x_t - w @ x_t  ==  x_t @ (I - w).T
    w_eff_t = (jnp.eye(C, dtype=jnp.float32) - w.astype(jnp.float32)).T  # (C, C)

    # --- batch sharding across TensorCores ------------------------------
    # Default 1 (v5e / v6e are single-TC: splitting only serializes and
    # shrinks the per-step slab).  Best-effort 2-way split on v7x when each
    # shard keeps >= 8 sublane rows.
    if batch_shards is None:
        batch_shards = 1
        try:
            kind = jax.devices()[0].device_kind.lower()
            if (("v7" in kind) or ("7x" in kind)) and B % 2 == 0 and (B // 2) >= 8:
                batch_shards = 2
        except Exception:
            pass
    nb = int(batch_shards)
    assert B % nb == 0, "batch_shards must divide batch"
    bb = B // nb

    # --- time tiling sized for VMEM --------------------------------------
    o_bytes = jnp.dtype(out_dtype).itemsize
    step_mult = 16 if o_bytes < 4 else 8          # packed-dtype sublane tile
    # Per-time-step VMEM bytes: 2x double-buffered f32 input, 2x output,
    # 1x f32 staging scratch.
    budget = 40 * (1 << 20)                        # fits v7x's 64 MiB VMEM
    bytes_per_t = bb * C * (2 * 4 + 2 * o_bytes + 4)
    cap = max(step_mult, min(int(tt_cap), budget // max(1, bytes_per_t)))
    cap = (cap // step_mult) * step_mult

    if T < step_mult:
        tt = T                                     # tiny sequence: one tile
    else:
        tt = min(cap, (T // step_mult) * step_mult)
        # Prefer an exact divisor of T (no ragged edge block) when a
        # reasonably large one exists; otherwise Pallas masks the ragged tail.
        cand = tt
        while cand >= step_mult:
            if T % cand == 0:
                tt = cand
                break
            cand -= step_mult
            if cand * 4 < tt:
                break
    nt = pl.cdiv(T, tt)
    fused_reshape = (tt % 8 == 0)

    # --- adaptive unroll (vreg pressure) ----------------------------------
    slab_vregs = max(1, ((bb + 7) // 8) * ((C + 127) // 128))
    unroll = max(1, min(8, 64 // (4 * slab_vregs)))
    unroll = min(unroll, max(1, tt))

    # --- explicit VMEM limit ----------------------------------------------
    tile_elems = bb * tt * C
    footprint = (2 * tile_elems * 4            # double-buffered input blocks
                 + 2 * tile_elems * o_bytes    # double-buffered output blocks
                 + 2 * C * C * 4               # resident w_eff_t block
                 + tile_elems * 4              # staging scratch
                 + bb * max(C, 128) * 4)       # membrane scratch
    vmem_limit = int(min(100 << 20, max(32 << 20, int(footprint * 1.5) + (2 << 20))))

    kernel = _make_leaky_kernel(beta, thr, bb, tt, C, unroll, fused_reshape)

    spk = pl.pallas_call(
        kernel,
        out_shape=jax.ShapeDtypeStruct((B, T, C), out_dtype),
        grid_spec=pltpu.PrefetchScalarGridSpec(
            num_scalar_prefetch=0,
            grid=(nb, nt),
            in_specs=[
                # Resident lateral weight: constant block index -> DMA'd once.
                pl.BlockSpec((C, C), lambda b, t: (0, 0)),
                pl.BlockSpec((bb, tt, C), lambda b, t: (b, t, 0)),
            ],
            out_specs=pl.BlockSpec((bb, tt, C), lambda b, t: (b, t, 0)),
            scratch_shapes=[pltpu.VMEM((bb, tt, C), jnp.float32),
                            pltpu.VMEM((bb, C), jnp.float32)],
        ),
        compiler_params=pltpu.CompilerParams(
            # batch axis is embarrassingly parallel; time axis is a serial
            # recurrence carried in the membrane scratch and must iterate
            # innermost (Pallas TPU convention: last grid axis is fastest).
            dimension_semantics=("parallel", "arbitrary"),
            vmem_limit_bytes=vmem_limit,
        ),
    )(w_eff_t, x)

    return spk


def stellate_reference(inp, w, *, beta: float = 0.95, thr: float = 0.8):
    """Pure-JAX reference mirroring the PyTorch/snntorch forward exactly."""
    x = inp.astype(jnp.float32)
    w = w.astype(jnp.float32)
    B, T, C = x.shape

    def step(mem, x_t):
        I = jnp.einsum("bc,dc->bd", x_t, w,
                       precision=jax.lax.Precision.HIGHEST)
        reset = (mem > thr).astype(jnp.float32)
        mem_new = beta * mem + (x_t - I) - reset * thr
        spk = (mem_new > thr).astype(jnp.float32)
        return mem_new, spk

    _, spks = jax.lax.scan(step, jnp.zeros((B, C), jnp.float32),
                           jnp.transpose(x, (1, 0, 2)))
    return jnp.transpose(spks, (1, 0, 2))


if __name__ == "__main__":
    # Small shapes consistent with the module's (batch, time, channels) input.
    B, T, C = 2, 8, 32
    sigma, thr, beta = 10.0, 0.8, 0.95

    key = jax.random.PRNGKey(0)
    inp = 1.5 * jax.random.normal(key, (B, T, C), dtype=jnp.float32)
    w = get_w(C, sigma)

    spks = jax.block_until_ready(stellate_forward(inp, w, beta=beta, thr=thr))
    ref = jax.block_until_ready(stellate_reference(inp, w, beta=beta, thr=thr))

    assert spks.shape == (B, T, C)
    # Spikes are exactly 0/1 (lossless in bf16).  The fused matmul changes fp
    # summation order vs the per-step reference, so tolerate (extremely rare)
    # near-threshold flips instead of requiring exact equality.
    mismatch_frac = float(jnp.mean(spks.astype(jnp.float32) != ref))
    assert mismatch_frac <= 0.01, f"spike mismatch fraction {mismatch_frac}"
    print("KERNEL_OK")
</pallas_src>

<mosaic_0001>
module attributes {stable_mosaic.version = 11 : i64} {
  func.func @kernel(%arg0: i32, %arg1: i32, %arg2: memref<32x32xf32, #tpu.memory_space<vmem>>, %arg3: memref<2x8x32xf32, #tpu.memory_space<vmem>>, %arg4: memref<2x8x32xbf16, #tpu.memory_space<vmem>>, %arg5: memref<2x8x32xf32, #tpu.memory_space<vmem>>, %arg6: memref<2x32xf32, #tpu.memory_space<vmem>>) attributes {dimension_semantics = [#tpu.dimension_semantics<parallel>, #tpu.dimension_semantics<arbitrary>], iteration_bounds = array<i64: 1, 1>, scalar_prefetch = 0 : i64, scratch_operands = 2 : i64, tpu.core_type = #tpu.core_type<tc>, window_params = [{pipeline_mode = #tpu.pipeline_mode<synchronous>, transform_indices = @transform_0, window_bounds = array<i64: 32, 32>}, {transform_indices = @transform_1, window_bounds = array<i64: 2, 8, 32>}, {transform_indices = @transform_2, window_bounds = array<i64: 2, 8, 32>}]} {
    %c0_i32 = arith.constant 0 : i32
    %0 = arith.cmpi eq, %arg1, %c0_i32 : i32
    %1 = arith.extui %0 : i1 to i32
    %c0_i32_0 = arith.constant 0 : i32
    %2 = arith.cmpi ne, %1, %c0_i32_0 : i32
    scf.if %2 {
      %cst_91 = arith.constant 0.000000e+00 : f32
      %174 = vector.broadcast %cst_91 : f32 to vector<2x32xf32>
      %c0_92 = arith.constant 0 : index
      %c0_93 = arith.constant 0 : index
      %175 = vector.load %arg6[%c0_92, %c0_93] : memref<2x32xf32, #tpu.memory_space<vmem>>, vector<2x32xf32>
      tpu.vector_store %arg6[%c0_92, %c0_93], %174 {strides = array<i32>} : memref<2x32xf32, #tpu.memory_space<vmem>>, vector<2x32xf32>,
    } else {
    }
    %c0 = arith.constant 0 : index
    %c0_1 = arith.constant 0 : index
    %c0_2 = arith.constant 0 : index
    %3 = vector.load %arg3[%c0, %c0_1, %c0_2] : memref<2x8x32xf32, #tpu.memory_space<vmem>>, vector<2x8x32xf32>
    %4 = vector.shape_cast %3 : vector<2x8x32xf32> to vector<16x32xf32>
    %c0_3 = arith.constant 0 : index
    %c0_4 = arith.constant 0 : index
    %5 = vector.load %arg2[%c0_3, %c0_4] : memref<32x32xf32, #tpu.memory_space<vmem>>, vector<32x32xf32>
    %cst = arith.constant dense<0.000000e+00> : vector<16x32xf32>
    %6 = tpu.matmul %4, %5, %cst {dimension_numbers = #tpu.dot_dimension_numbers<[1], [0], [0], [1], [0, 0, 1, 1], [], []>} : vector<16x32xf32>, vector<32x32xf32>, vector<16x32xf32> -> vector<16x32xf32>
    %7 = vector.shape_cast %6 : vector<16x32xf32> to vector<2x8x32xf32>
    %c0_5 = arith.constant 0 : index
    %c0_6 = arith.constant 0 : index
    %c0_7 = arith.constant 0 : index
    %8 = vector.load %arg5[%c0_5, %c0_6, %c0_7] : memref<2x8x32xf32, #tpu.memory_space<vmem>>, vector<2x8x32xf32>
    tpu.vector_store %arg5[%c0_5, %c0_6, %c0_7], %7 {strides = array<i32>} : memref<2x8x32xf32, #tpu.memory_space<vmem>>, vector<2x8x32xf32>,
    %c0_8 = arith.constant 0 : index
    %c0_9 = arith.constant 0 : index
    %9 = vector.load %arg6[%c0_8, %c0_9] : memref<2x32xf32, #tpu.memory_space<vmem>>, vector<2x32xf32>
    %c0_i32_10 = arith.constant 0 : i32
    %c0_11 = arith.constant 0 : index
    %10 = arith.index_cast %c0_i32_10 : i32 to index
    %c0_12 = arith.constant 0 : index
    %11 = vector.load %arg5[%c0_11, %10, %c0_12] : memref<2x8x32xf32, #tpu.memory_space<vmem>>, vector<2x1x32xf32>
    %12 = vector.shape_cast %11 : vector<2x1x32xf32> to vector<2x32xf32>
    %cst_13 = arith.constant 8.000000e-01 : f32
    %13 = vector.broadcast %cst_13 : f32 to vector<2x32xf32>
    %14 = arith.cmpf ogt, %9, %13 : vector<2x32xf32>
    %cst_14 = arith.constant 8.000000e-01 : f32
    %cst_15 = arith.constant 0.000000e+00 : f32
    %15 = vector.broadcast %cst_14 : f32 to vector<2x32xf32>
    %16 = vector.broadcast %cst_15 : f32 to vector<2x32xf32>
    %17 = arith.select %14, %15, %16 : vector<2x32xi1>, vector<2x32xf32>
    %cst_16 = arith.constant 0.949999988 : f32
    %18 = vector.broadcast %cst_16 : f32 to vector<2x32xf32>
    %19 = arith.mulf %18, %9 : vector<2x32xf32>
    %20 = arith.addf %19, %12 : vector<2x32xf32>
    %21 = arith.subf %20, %17 : vector<2x32xf32>
    %cst_17 = arith.constant 8.000000e-01 : f32
    %22 = vector.broadcast %cst_17 : f32 to vector<2x32xf32>
    %23 = arith.cmpf ogt, %21, %22 : vector<2x32xf32>
    %24 = arith.extui %23 : vector<2x32xi1> to vector<2x32xi32>
    %25 = arith.sitofp %24 : vector<2x32xi32> to vector<2x32xf32>
    %c0_18 = arith.constant 0 : index
    %26 = arith.index_cast %c0_i32_10 : i32 to index
    %c0_19 = arith.constant 0 : index
    %27 = vector.load %arg5[%c0_18, %26, %c0_19] : memref<2x8x32xf32, #tpu.memory_space<vmem>>, vector<2x1x32xf32>
    %28 = vector.shape_cast %27 : vector<2x1x32xf32> to vector<2x32xf32>
    %29 = vector.shape_cast %25 : vector<2x32xf32> to vector<2x1x32xf32>
    tpu.vector_store %arg5[%c0_18, %26, %c0_19], %29 {strides = array<i32>} : memref<2x8x32xf32, #tpu.memory_space<vmem>>, vector<2x1x32xf32>,
    %c1_i32 = arith.constant 1 : i32
    %c0_20 = arith.constant 0 : index
    %30 = arith.index_cast %c1_i32 : i32 to index
    %c0_21 = arith.constant 0 : index
    %31 = vector.load %arg5[%c0_20, %30, %c0_21] : memref<2x8x32xf32, #tpu.memory_space<vmem>>, vector<2x1x32xf32>
    %32 = vector.shape_cast %31 : vector<2x1x32xf32> to vector<2x32xf32>
    %cst_22 = arith.constant 8.000000e-01 : f32
    %33 = vector.broadcast %cst_22 : f32 to vector<2x32xf32>
    %34 = arith.cmpf ogt, %21, %33 : vector<2x32xf32>
    %cst_23 = arith.constant 8.000000e-01 : f32
    %cst_24 = arith.constant 0.000000e+00 : f32
    %35 = vector.broadcast %cst_23 : f32 to vector<2x32xf32>
    %36 = vector.broadcast %cst_24 : f32 to vector<2x32xf32>
    %37 = arith.select %34, %35, %36 : vector<2x32xi1>, vector<2x32xf32>
    %cst_25 = arith.constant 0.949999988 : f32
    %38 = vector.broadcast %cst_25 : f32 to vector<2x32xf32>
    %39 = arith.mulf %38, %21 : vector<2x32xf32>
    %40 = arith.addf %39, %32 : vector<2x32xf32>
    %41 = arith.subf %40, %37 : vector<2x32xf32>
    %cst_26 = arith.constant 8.000000e-01 : f32
    %42 = vector.broadcast %cst_26 : f32 to vector<2x32xf32>
    %43 = arith.cmpf ogt, %41, %42 : vector<2x32xf32>
    %44 = arith.extui %43 : vector<2x32xi1> to vector<2x32xi32>
    %45 = arith.sitofp %44 : vector<2x32xi32> to vector<2x32xf32>
    %c0_27 = arith.constant 0 : index
    %46 = arith.index_cast %c1_i32 : i32 to index
    %c0_28 = arith.constant 0 : index
    %47 = vector.load %arg5[%c0_27, %46, %c0_28] : memref<2x8x32xf32, #tpu.memory_space<vmem>>, vector<2x1x32xf32>
    %48 = vector.shape_cast %47 : vector<2x1x32xf32> to vector<2x32xf32>
    %49 = vector.shape_cast %45 : vector<2x32xf32> to vector<2x1x32xf32>
    tpu.vector_store %arg5[%c0_27, %46, %c0_28], %49 {strides = array<i32>} : memref<2x8x32xf32, #tpu.memory_space<vmem>>, vector<2x1x32xf32>,
    %c2_i32 = arith.constant 2 : i32
    %c0_29 = arith.constant 0 : index
    %50 = arith.index_cast %c2_i32 : i32 to index
    %c0_30 = arith.constant 0 : index
    %51 = vector.load %arg5[%c0_29, %50, %c0_30] : memref<2x8x32xf32, #tpu.memory_space<vmem>>, vector<2x1x32xf32>
    %52 = vector.shape_cast %51 : vector<2x1x32xf32> to vector<2x32xf32>
    %cst_31 = arith.constant 8.000000e-01 : f32
    %53 = vector.broadcast %cst_31 : f32 to vector<2x32xf32>
    %54 = arith.cmpf ogt, %41, %53 : vector<2x32xf32>
    %cst_32 = arith.constant 8.000000e-01 : f32
    %cst_33 = arith.constant 0.000000e+00 : f32
    %55 = vector.broadcast %cst_32 : f32 to vector<2x32xf32>
    %56 = vector.broadcast %cst_33 : f32 to vector<2x32xf32>
    %57 = arith.select %54, %55, %56 : vector<2x32xi1>, vector<2x32xf32>
    %cst_34 = arith.constant 0.949999988 : f32
    %58 = vector.broadcast %cst_34 : f32 to vector<2x32xf32>
    %59 = arith.mulf %58, %41 : vector<2x32xf32>
    %60 = arith.addf %59, %52 : vector<2x32xf32>
    %61 = arith.subf %60, %57 : vector<2x32xf32>
    %cst_35 = arith.constant 8.000000e-01 : f32
    %62 = vector.broadcast %cst_35 : f32 to vector<2x32xf32>
    %63 = arith.cmpf ogt, %61, %62 : vector<2x32xf32>
    %64 = arith.extui %63 : vector<2x32xi1> to vector<2x32xi32>
    %65 = arith.sitofp %64 : vector<2x32xi32> to vector<2x32xf32>
    %c0_36 = arith.constant 0 : index
    %66 = arith.index_cast %c2_i32 : i32 to index
    %c0_37 = arith.constant 0 : index
    %67 = vector.load %arg5[%c0_36, %66, %c0_37] : memref<2x8x32xf32, #tpu.memory_space<vmem>>, vector<2x1x32xf32>
    %68 = vector.shape_cast %67 : vector<2x1x32xf32> to vector<2x32xf32>
    %69 = vector.shape_cast %65 : vector<2x32xf32> to vector<2x1x32xf32>
    tpu.vector_store %arg5[%c0_36, %66, %c0_37], %69 {strides = array<i32>} : memref<2x8x32xf32, #tpu.memory_space<vmem>>, vector<2x1x32xf32>,
    %c3_i32 = arith.constant 3 : i32
    %c0_38 = arith.constant 0 : index
    %70 = arith.index_cast %c3_i32 : i32 to index
    %c0_39 = arith.constant 0 : index
    %71 = vector.load %arg5[%c0_38, %70, %c0_39] : memref<2x8x32xf32, #tpu.memory_space<vmem>>, vector<2x1x32xf32>
    %72 = vector.shape_cast %71 : vector<2x1x32xf32> to vector<2x32xf32>
    %cst_40 = arith.constant 8.000000e-01 : f32
    %73 = vector.broadcast %cst_40 : f32 to vector<2x32xf32>
    %74 = arith.cmpf ogt, %61, %73 : vector<2x32xf32>
    %cst_41 = arith.constant 8.000000e-01 : f32
    %cst_42 = arith.constant 0.000000e+00 : f32
    %75 = vector.broadcast %cst_41 : f32 to vector<2x32xf32>
    %76 = vector.broadcast %cst_42 : f32 to vector<2x32xf32>
    %77 = arith.select %74, %75, %76 : vector<2x32xi1>, vector<2x32xf32>
    %cst_43 = arith.constant 0.949999988 : f32
    %78 = vector.broadcast %cst_43 : f32 to vector<2x32xf32>
    %79 = arith.mulf %78, %61 : vector<2x32xf32>
    %80 = arith.addf %79, %72 : vector<2x32xf32>
    %81 = arith.subf %80, %77 : vector<2x32xf32>
    %cst_44 = arith.constant 8.000000e-01 : f32
    %82 = vector.broadcast %cst_44 : f32 to vector<2x32xf32>
    %83 = arith.cmpf ogt, %81, %82 : vector<2x32xf32>
    %84 = arith.extui %83 : vector<2x32xi1> to vector<2x32xi32>
    %85 = arith.sitofp %84 : vector<2x32xi32> to vector<2x32xf32>
    %c0_45 = arith.constant 0 : index
    %86 = arith.index_cast %c3_i32 : i32 to index
    %c0_46 = arith.constant 0 : index
    %87 = vector.load %arg5[%c0_45, %86, %c0_46] : memref<2x8x32xf32, #tpu.memory_space<vmem>>, vector<2x1x32xf32>
    %88 = vector.shape_cast %87 : vector<2x1x32xf32> to vector<2x32xf32>
    %89 = vector.shape_cast %85 : vector<2x32xf32> to vector<2x1x32xf32>
    tpu.vector_store %arg5[%c0_45, %86, %c0_46], %89 {strides = array<i32>} : memref<2x8x32xf32, #tpu.memory_space<vmem>>, vector<2x1x32xf32>,
    %c4_i32 = arith.constant 4 : i32
    %c0_47 = arith.constant 0 : index
    %90 = arith.index_cast %c4_i32 : i32 to index
    %c0_48 = arith.constant 0 : index
    %91 = vector.load %arg5[%c0_47, %90, %c0_48] : memref<2x8x32xf32, #tpu.memory_space<vmem>>, vector<2x1x32xf32>
    %92 = vector.shape_cast %91 : vector<2x1x32xf32> to vector<2x32xf32>
    %cst_49 = arith.constant 8.000000e-01 : f32
    %93 = vector.broadcast %cst_49 : f32 to vector<2x32xf32>
    %94 = arith.cmpf ogt, %81, %93 : vector<2x32xf32>
    %cst_50 = arith.constant 8.000000e-01 : f32
    %cst_51 = arith.constant 0.000000e+00 : f32
    %95 = vector.broadcast %cst_50 : f32 to vector<2x32xf32>
    %96 = vector.broadcast %cst_51 : f32 to vector<2x32xf32>
    %97 = arith.select %94, %95, %96 : vector<2x32xi1>, vector<2x32xf32>
    %cst_52 = arith.constant 0.949999988 : f32
    %98 = vector.broadcast %cst_52 : f32 to vector<2x32xf32>
    %99 = arith.mulf %98, %81 : vector<2x32xf32>
    %100 = arith.addf %99, %92 : vector<2x32xf32>
    %101 = arith.subf %100, %97 : vector<2x32xf32>
    %cst_53 = arith.constant 8.000000e-01 : f32
    %102 = vector.broadcast %cst_53 : f32 to vector<2x32xf32>
    %103 = arith.cmpf ogt, %101, %102 : vector<2x32xf32>
    %104 = arith.extui %103 : vector<2x32xi1> to vector<2x32xi32>
    %105 = arith.sitofp %104 : vector<2x32xi32> to vector<2x32xf32>
    %c0_54 = arith.constant 0 : index
    %106 = arith.index_cast %c4_i32 : i32 to index
    %c0_55 = arith.constant 0 : index
    %107 = vector.load %arg5[%c0_54, %106, %c0_55] : memref<2x8x32xf32, #tpu.memory_space<vmem>>, vector<2x1x32xf32>
    %108 = vector.shape_cast %107 : vector<2x1x32xf32> to vector<2x32xf32>
    %109 = vector.shape_cast %105 : vector<2x32xf32> to vector<2x1x32xf32>
    tpu.vector_store %arg5[%c0_54, %106, %c0_55], %109 {strides = array<i32>} : memref<2x8x32xf32, #tpu.memory_space<vmem>>, vector<2x1x32xf32>,
    %c5_i32 = arith.constant 5 : i32
    %c0_56 = arith.constant 0 : index
    %110 = arith.index_cast %c5_i32 : i32 to index
    %c0_57 = arith.constant 0 : index
    %111 = vector.load %arg5[%c0_56, %110, %c0_57] : memref<2x8x32xf32, #tpu.memory_space<vmem>>, vector<2x1x32xf32>
    %112 = vector.shape_cast %111 : vector<2x1x32xf32> to vector<2x32xf32>
    %cst_58 = arith.constant 8.000000e-01 : f32
    %113 = vector.broadcast %cst_58 : f32 to vector<2x32xf32>
    %114 = arith.cmpf ogt, %101, %113 : vector<2x32xf32>
    %cst_59 = arith.constant 8.000000e-01 : f32
    %cst_60 = arith.constant 0.000000e+00 : f32
    %115 = vector.broadcast %cst_59 : f32 to vector<2x32xf32>
    %116 = vector.broadcast %cst_60 : f32 to vector<2x32xf32>
    %117 = arith.select %114, %115, %116 : vector<2x32xi1>, vector<2x32xf32>
    %cst_61 = arith.constant 0.949999988 : f32
    %118 = vector.broadcast %cst_61 : f32 to vector<2x32xf32>
    %119 = arith.mulf %118, %101 : vector<2x32xf32>
    %120 = arith.addf %119, %112 : vector<2x32xf32>
    %121 = arith.subf %120, %117 : vector<2x32xf32>
    %cst_62 = arith.constant 8.000000e-01 : f32
    %122 = vector.broadcast %cst_62 : f32 to vector<2x32xf32>
    %123 = arith.cmpf ogt, %121, %122 : vector<2x32xf32>
    %124 = arith.extui %123 : vector<2x32xi1> to vector<2x32xi32>
    %125 = arith.sitofp %124 : vector<2x32xi32> to vector<2x32xf32>
    %c0_63 = arith.constant 0 : index
    %126 = arith.index_cast %c5_i32 : i32 to index
    %c0_64 = arith.constant 0 : index
    %127 = vector.load %arg5[%c0_63, %126, %c0_64] : memref<2x8x32xf32, #tpu.memory_space<vmem>>, vector<2x1x32xf32>
    %128 = vector.shape_cast %127 : vector<2x1x32xf32> to vector<2x32xf32>
    %129 = vector.shape_cast %125 : vector<2x32xf32> to vector<2x1x32xf32>
    tpu.vector_store %arg5[%c0_63, %126, %c0_64], %129 {strides = array<i32>} : memref<2x8x32xf32, #tpu.memory_space<vmem>>, vector<2x1x32xf32>,
    %c6_i32 = arith.constant 6 : i32
    %c0_65 = arith.constant 0 : index
    %130 = arith.index_cast %c6_i32 : i32 to index
    %c0_66 = arith.constant 0 : index
    %131 = vector.load %arg5[%c0_65, %130, %c0_66] : memref<2x8x32xf32, #tpu.memory_space<vmem>>, vector<2x1x32xf32>
    %132 = vector.shape_cast %131 : vector<2x1x32xf32> to vector<2x32xf32>
    %cst_67 = arith.constant 8.000000e-01 : f32
    %133 = vector.broadcast %cst_67 : f32 to vector<2x32xf32>
    %134 = arith.cmpf ogt, %121, %133 : vector<2x32xf32>
    %cst_68 = arith.constant 8.000000e-01 : f32
    %cst_69 = arith.constant 0.000000e+00 : f32
    %135 = vector.broadcast %cst_68 : f32 to vector<2x32xf32>
    %136 = vector.broadcast %cst_69 : f32 to vector<2x32xf32>
    %137 = arith.select %134, %135, %136 : vector<2x32xi1>, vector<2x32xf32>
    %cst_70 = arith.constant 0.949999988 : f32
    %138 = vector.broadcast %cst_70 : f32 to vector<2x32xf32>
    %139 = arith.mulf %138, %121 : vector<2x32xf32>
    %140 = arith.addf %139, %132 : vector<2x32xf32>
    %141 = arith.subf %140, %137 : vector<2x32xf32>
    %cst_71 = arith.constant 8.000000e-01 : f32
    %142 = vector.broadcast %cst_71 : f32 to vector<2x32xf32>
    %143 = arith.cmpf ogt, %141, %142 : vector<2x32xf32>
    %144 = arith.extui %143 : vector<2x32xi1> to vector<2x32xi32>
    %145 = arith.sitofp %144 : vector<2x32xi32> to vector<2x32xf32>
    %c0_72 = arith.constant 0 : index
    %146 = arith.index_cast %c6_i32 : i32 to index
    %c0_73 = arith.constant 0 : index
    %147 = vector.load %arg5[%c0_72, %146, %c0_73] : memref<2x8x32xf32, #tpu.memory_space<vmem>>, vector<2x1x32xf32>
    %148 = vector.shape_cast %147 : vector<2x1x32xf32> to vector<2x32xf32>
    %149 = vector.shape_cast %145 : vector<2x32xf32> to vector<2x1x32xf32>
    tpu.vector_store %arg5[%c0_72, %146, %c0_73], %149 {strides = array<i32>} : memref<2x8x32xf32, #tpu.memory_space<vmem>>, vector<2x1x32xf32>,
    %c7_i32 = arith.constant 7 : i32
    %c0_74 = arith.constant 0 : index
    %150 = arith.index_cast %c7_i32 : i32 to index
    %c0_75 = arith.constant 0 : index
    %151 = vector.load %arg5[%c0_74, %150, %c0_75] : memref<2x8x32xf32, #tpu.memory_space<vmem>>, vector<2x1x32xf32>
    %152 = vector.shape_cast %151 : vector<2x1x32xf32> to vector<2x32xf32>
    %cst_76 = arith.constant 8.000000e-01 : f32
    %153 = vector.broadcast %cst_76 : f32 to vector<2x32xf32>
    %154 = arith.cmpf ogt, %141, %153 : vector<2x32xf32>
    %cst_77 = arith.constant 8.000000e-01 : f32
    %cst_78 = arith.constant 0.000000e+00 : f32
    %155 = vector.broadcast %cst_77 : f32 to vector<2x32xf32>
    %156 = vector.broadcast %cst_78 : f32 to vector<2x32xf32>
    %157 = arith.select %154, %155, %156 : vector<2x32xi1>, vector<2x32xf32>
    %cst_79 = arith.constant 0.949999988 : f32
    %158 = vector.broadcast %cst_79 : f32 to vector<2x32xf32>
    %159 = arith.mulf %158, %141 : vector<2x32xf32>
    %160 = arith.addf %159, %152 : vector<2x32xf32>
    %161 = arith.subf %160, %157 : vector<2x32xf32>
    %cst_80 = arith.constant 8.000000e-01 : f32
    %162 = vector.broadcast %cst_80 : f32 to vector<2x32xf32>
    %163 = arith.cmpf ogt, %161, %162 : vector<2x32xf32>
    %164 = arith.extui %163 : vector<2x32xi1> to vector<2x32xi32>
    %165 = arith.sitofp %164 : vector<2x32xi32> to vector<2x32xf32>
    %c0_81 = arith.constant 0 : index
    %166 = arith.index_cast %c7_i32 : i32 to index
    %c0_82 = arith.constant 0 : index
    %167 = vector.load %arg5[%c0_81, %166, %c0_82] : memref<2x8x32xf32, #tpu.memory_space<vmem>>, vector<2x1x32xf32>
    %168 = vector.shape_cast %167 : vector<2x1x32xf32> to vector<2x32xf32>
    %169 = vector.shape_cast %165 : vector<2x32xf32> to vector<2x1x32xf32>
    tpu.vector_store %arg5[%c0_81, %166, %c0_82], %169 {strides = array<i32>} : memref<2x8x32xf32, #tpu.memory_space<vmem>>, vector<2x1x32xf32>,
    %c8_i32 = arith.constant 8 : i32
    %c0_83 = arith.constant 0 : index
    %c0_84 = arith.constant 0 : index
    %170 = vector.load %arg6[%c0_83, %c0_84] : memref<2x32xf32, #tpu.memory_space<vmem>>, vector<2x32xf32>
    tpu.vector_store %arg6[%c0_83, %c0_84], %161 {strides = array<i32>} : memref<2x32xf32, #tpu.memory_space<vmem>>, vector<2x32xf32>,
    %c0_85 = arith.constant 0 : index
    %c0_86 = arith.constant 0 : index
    %c0_87 = arith.constant 0 : index
    %171 = vector.load %arg5[%c0_85, %c0_86, %c0_87] : memref<2x8x32xf32, #tpu.memory_space<vmem>>, vector<2x8x32xf32>
    %172 = arith.truncf %171 : vector<2x8x32xf32> to vector<2x8x32xbf16>
    %c0_88 = arith.constant 0 : index
    %c0_89 = arith.constant 0 : index
    %c0_90 = arith.constant 0 : index
    %173 = vector.load %arg4[%c0_88, %c0_89, %c0_90] : memref<2x8x32xbf16, #tpu.memory_space<vmem>>, vector<2x8x32xbf16>
    tpu.vector_store %arg4[%c0_88, %c0_89, %c0_90], %172 {strides = array<i32>} : memref<2x8x32xbf16, #tpu.memory_space<vmem>>, vector<2x8x32xbf16>,
    return
  }
  func.func @transform_0(%arg0: i32, %arg1: i32) -> (i32, i32) {
    %c0_i32 = arith.constant 0 : i32
    %c0_i32_0 = arith.constant 0 : i32
    %c0_i32_1 = arith.constant 0 : i32
    return %c0_i32, %c0_i32_0 : i32, i32
  }
  func.func @transform_1(%arg0: i32, %arg1: i32) -> (i32, i32, i32) {
    %c0_i32 = arith.constant 0 : i32
    %c0_i32_0 = arith.constant 0 : i32
    return %arg0, %arg1, %c0_i32 : i32, i32, i32
  }
  func.func @transform_2(%arg0: i32, %arg1: i32) -> (i32, i32, i32) {
    %c0_i32 = arith.constant 0 : i32
    %c0_i32_0 = arith.constant 0 : i32
    return %arg0, %arg1, %c0_i32 : i32, i32, i32
  }
}

</mosaic_0001>

<llo_original>
// kernel: stellate_forward.1
$region0: #{stellate_forward.1}
  #allocation0 [shape = 'u32[]', space=smem, size = 0x4, offset = 0x4, fixed_abs, tag = 'smem constant byte address 0x4 - core index']
  #allocation1 [shape = 'u32[144,128]{1,0:T(1,128)}', space=vmem, size = 0x12000, scoped, tag = 'internal scratch']
  #allocation2 [shape = 'f32[2,8,32]{2,1,0:T(8,128)}', space=vmem, size = 0x2000, scoped, tag = 'scratch operand']
  #allocation3 [shape = 'f32[2,32]{1,0:T(2,128)}', space=vmem, size = 0x400, scoped, tag = 'scratch operand']
  %s0 = inlined_call_operand.vmem [shape: f32[32,32], index: 0, kind: input, shape index: {}]
  %s1 = inlined_call_operand.vmem [shape: f32[2,8,32], index: 1, kind: input, shape index: {}]
  %s2 = inlined_call_operand.hbm [shape: bf16[2,8,32], index: 2, kind: output, shape index: {}]
  %s3 = sld [smem:[#allocation0]]
  $region22: #{stellate_forward.1} parent=0
    _
  %s5 = ssub.s32 1, %s3
  %s6 = scalar_select 0, %s5, %s3
  $region1: #{stellate_forward.1} parent=0
    #allocation4 [shape = 'u8[4096]{0}', space=vmem, size = 0x1000, scoped, tag = 'output window, operand 0, single buffered']
    #allocation5 [shape = 's32[1]{0}', space=sflag, size = 0x4, scoped, tag = 'scoped memory for stellate_forward.1']
    %7 = vsyncpa [#allocation5], 0
    // Predicated region
    $region2: #{stellate_forward.1} parent=1 // pred_check
      _
    $region3: #{stellate_forward.1} parent=1 // pred_check_branch
      %9 = sbr.rel (0) target = $region5
    $region4: #{stellate_forward.1} parent=1 // pred_region
      _
    $region5: #{stellate_forward.1} parent=1 // pred_fallthru
      _
    // Predicated region
    $region6: #{stellate_forward.1} parent=1 // pred_check
      _
    $region7: #{stellate_forward.1} parent=1 // pred_check_branch
      %11 = sbr.rel (0) target = $region9
    $region8: #{stellate_forward.1} parent=1 // pred_region
      _
    $region9: #{stellate_forward.1} parent=1 // pred_fallthru
      _
    %p12 = scmp.eq.s32.totalorder 0, 0
    // Predicated region
    $region10: #{stellate_forward.1} parent=1 // pred_check
      %p13 = pneg %p12
    $region11: #{stellate_forward.1} parent=1 // pred_check_branch
      %15 = sbr.rel (%p13) target = $region13
    $region12: #{stellate_forward.1} parent=1 // pred_region
      %vm16 = vcmask 254976
      %17 = vst.msk [vmem:[#allocation3] sm:$0x3] %vm16, 0.0
    $region13: #{stellate_forward.1} parent=1 // pred_fallthru
      _
    %v18 = vld [vmem:[%s1] sm:$0xff]
    %v19 = vld [vmem:[%s1 + $0x8] sm:$0xff]
    %v20 = vld [vmem:[%s0] sm:$0xff]
    %v21 = vld [vmem:[%s0 + $0x8] sm:$0xff]
    %v22 = vld [vmem:[%s0 + $0x10] sm:$0xff]
    %v23 = vld [vmem:[%s0 + $0x18] sm:$0xff]
    %vm24 = vcmask 261120
    %v26 = vsel %vm24, %v18, 0
    %v29 = vsel %vm24, %v19, 0
    %31 = vmatprep.subr.mxu0 0.0
    %32 = vmatpush1.msra.mxu0 %v20
    %33 = vmatprep.subr.mxu0 0.0
    %34 = vmatpush1.msra.mxu0 %v21
    %35 = vmatprep.subr.mxu0 0.0
    %36 = vmatpush1.msra.mxu0 %v22
    %37 = vmatprep.subr.mxu0 0.0
    %38 = vmatpush1.msra.mxu0 %v23
    %39 = vmatprep.subr.mxu0 0.0
    %40 = vmatpush1.msra.mxu0 0.0
    %41 = vmatprep.subr.mxu0 0.0
    %42 = vmatpush1.msra.mxu0 0.0
    %43 = vmatprep.subr.mxu0 0.0
    %44 = vmatpush1.msra.mxu0 0.0
    %45 = vmatprep.subr.mxu0 0.0
    %46 = vmatpush1.msra.mxu0 0.0
    %47 = vmatprep.subr.mxu0 0.0
    %48 = vmatpush1.msra.mxu0 0.0
    %49 = vmatprep.subr.mxu0 0.0
    %50 = vmatpush1.msra.mxu0 0.0
    %51 = vmatprep.subr.mxu0 0.0
    %52 = vmatpush1.msra.mxu0 0.0
    %53 = vmatprep.subr.mxu0 0.0
    %54 = vmatpush1.msra.mxu0 0.0
    %55 = vmatprep.subr.mxu0 0.0
    %56 = vmatpush1.msra.mxu0 0.0
    %57 = vmatprep.subr.mxu0 0.0
    %58 = vmatpush1.msra.mxu0 0.0
    %59 = vmatprep.subr.mxu0 0.0
    %60 = vmatpush1.msra.mxu0 0.0
    %61 = vmatprep.subr.mxu0 0.0
    %62 = vmatpush1.msra.mxu0 0.0
    %63 = vmatprep.subr.mxu0 0.0
    %64 = vmatpush1.msra.mxu0 0.0
    %65 = vmatprep.subr.mxu0 0.0
    %66 = vmatpush1.msra.mxu0 0.0
    %67 = vmatprep.subr.mxu0 0.0
    %68 = vmatpush1.msra.mxu0 0.0
    %69 = vmatprep.subr.mxu0 0.0
    %70 = vmatpush1.msra.mxu0 0.0
    %71 = vmatprep.subr.mxu0 0.0
    %72 = vmatpush1.msra.mxu0 0.0
    %73 = vmatprep.subr.mxu0 0.0
    %74 = vmatpush1.msra.mxu0 0.0
    %75 = vmatprep.subr.mxu0 0.0
    %76 = vmatpush1.msra.mxu0 0.0
    %77 = vmatprep.subr.mxu0 0.0
    %78 = vmatpush1.msra.mxu0 0.0
    %79 = vmatprep.subr.mxu0 0.0
    %80 = vmatpush1.msra.mxu0 0.0
    %81 = vmatprep.subr.mxu0 0.0
    %82 = vmatpush1.msra.mxu0 0.0
    %83 = vmatprep.subr.mxu0 0.0
    %84 = vmatpush1.msra.mxu0 0.0
    %85 = vmatprep.subr.mxu0 0.0
    %86 = vmatpush1.msra.mxu0 0.0
    %87 = vmatprep.subr.mxu0 0.0
    %88 = vmatpush1.msra.mxu0 0.0
    %89 = vmatprep.subr.mxu0 0.0
    %90 = vmatpush1.msra.mxu0 0.0
    %91 = vmatprep.subr.mxu0 0.0
    %92 = vmatpush1.msra.mxu0 0.0
    %93 = vmatprep.subr.mxu0 0.0
    %94 = vmatpush1.msra.mxu0 0.0
    %95 = vmatprep.mubr.f32.mxu0 0.0
    %96 = vmatmul.mubr.f32.gmra.mrb[0].mxu0 %v26
    %v97 = vpop.f32.mrb[0].mxu0
    %v98 = vadd.f32 0.0, %v97
    %v99 = vpop.f32.mrb[0].mxu0
    %100 = vmatprep.mubr.f32.mxu0 0.0
    %101 = vmatmul.mubr.f32.gmra.mrb[0].mxu0 %v29
    %v102 = vpop.f32.mrb[0].mxu0
    %v103 = vadd.f32 0.0, %v102
    %v104 = vpop.f32.mrb[0].mxu0
    %105 = vdwg.mxu0
    %106 = vst.msk [vmem:[#allocation2] sm:$0xff] %vm24, %v98
    %107 = vst.msk [vmem:[#allocation2 + $0x8] sm:$0xff] %vm24, %v103
    %v108 = vld [vmem:[#allocation3] sm:$0x3]
    %v109 = vld [vmem:[#allocation2] sm:$0x1]
    %v110 = vld [vmem:[#allocation2 + $0x8] sm:$0x1]
    %vm111 = vcmp.gt.f32.partialorder %v108, 0.8
    %v112 = vsel %vm111, 0.8, 0.0
    %v113 = vmul.f32 %v108, 0.95
    %v116 = vrot.slane %v110, 7
    %vm117 = vcmask 1041409
    %v118 = vsel %vm117, %v116, %v109
    %v120 = vadd.f32 %v113, %v118
    %v121 = vsub.f32 %v120, %v112
    %vm122 = vcmp.gt.f32.partialorder %v121, 0.8
    %v123 = vsel %vm122, 1, 0
    %v124 = vcvt.s32.f32 %v123
    %v127 = vunpack.c.l.s4 1966171168
    %v128 = vunpack.c.0.s8 %v127
    %v129 = vlaneseq
    %v130 = vshrl.u32 %v129, 7
    %v131 = vsub.s32 %v128, %v130
    %v132 = vrot.slane %v124, %v131
    %v133 = vcombine.high %v132, %v132
    %v135 = vunpack.c.l.s4 1966171168
    %v136 = vunpack.c.0.s8 %v135
    %v137 = vlaneseq
    %v138 = vshrl.u32 %v137, 7
    %v139 = vsub.s32 %v136, %v138
    %v140 = vrot.slane %v132, %v139
    %v142 = vunpack.c.l.s4 1966171168
    %v143 = vunpack.c.0.s8 %v142
    %v144 = vlaneseq
    %v145 = vshrl.u32 %v144, 7
    %v146 = vsub.s32 %v143, %v145
    %v147 = vrot.slane %v133, %v146
    %vm150 = vcmask 253952
    %151 = vst.msk [vmem:[#allocation2] sm:$0x1] %vm150, %v140
    %152 = vst.msk [vmem:[#allocation2 + $0x8] sm:$0x1] %vm150, %v147
    %v153 = vld [vmem:[#allocation2 + $0x1] sm:$0x1]
    %v154 = vld [vmem:[#allocation2 + $0x9] sm:$0x1]
    %v155 = vsel %vm122, 0.8, 0.0
    %v156 = vmul.f32 %v121, 0.95
    %v159 = vrot.slane %v154, 7
    %v160 = vsel %vm117, %v159, %v153
    %v162 = vadd.f32 %v156, %v160
    %v163 = vsub.f32 %v162, %v155
    %vm164 = vcmp.gt.f32.partialorder %v163, 0.8
    %v165 = vsel %vm164, 1, 0
    %v166 = vcvt.s32.f32 %v165
    %v169 = vunpack.c.l.s4 1966171168
    %v170 = vunpack.c.0.s8 %v169
    %v171 = vlaneseq
    %v172 = vshrl.u32 %v171, 7
    %v173 = vsub.s32 %v170, %v172
    %v174 = vrot.slane %v166, %v173
    %v175 = vcombine.high %v174, %v174
    %v177 = vunpack.c.l.s4 1966171168
    %v178 = vunpack.c.0.s8 %v177
    %v179 = vlaneseq
    %v180 = vshrl.u32 %v179, 7
    %v181 = vsub.s32 %v178, %v180
    %v182 = vrot.slane %v174, %v181
    %v184 = vunpack.c.l.s4 1966171168
    %v185 = vunpack.c.0.s8 %v184
    %v186 = vlaneseq
    %v187 = vshrl.u32 %v186, 7
    %v188 = vsub.s32 %v185, %v187
    %v189 = vrot.slane %v175, %v188
    %192 = vst.msk [vmem:[#allocation2 + $0x1] sm:$0x1] %vm150, %v182
    %193 = vst.msk [vmem:[#allocation2 + $0x9] sm:$0x1] %vm150, %v189
    %v194 = vld [vmem:[#allocation2 + $0x2] sm:$0x1]
    %v195 = vld [vmem:[#allocation2 + $0xa] sm:$0x1]
    %v196 = vsel %vm164, 0.8, 0.0
    %v197 = vmul.f32 %v163, 0.95
    %v200 = vrot.slane %v195, 7
    %v201 = vsel %vm117, %v200, %v194
    %v203 = vadd.f32 %v197, %v201
    %v204 = vsub.f32 %v203, %v196
    %vm205 = vcmp.gt.f32.partialorder %v204, 0.8
    %v206 = vsel %vm205, 1, 0
    %v207 = vcvt.s32.f32 %v206
    %v210 = vunpack.c.l.s4 1966171168
    %v211 = vunpack.c.0.s8 %v210
    %v212 = vlaneseq
    %v213 = vshrl.u32 %v212, 7
    %v214 = vsub.s32 %v211, %v213
    %v215 = vrot.slane %v207, %v214
    %v216 = vcombine.high %v215, %v215
    %v218 = vunpack.c.l.s4 1966171168
    %v219 = vunpack.c.0.s8 %v218
    %v220 = vlaneseq
    %v221 = vshrl.u32 %v220, 7
    %v222 = vsub.s32 %v219, %v221
    %v223 = vrot.slane %v215, %v222
    %v225 = vunpack.c.l.s4 1966171168
    %v226 = vunpack.c.0.s8 %v225
    %v227 = vlaneseq
    %v228 = vshrl.u32 %v227, 7
    %v229 = vsub.s32 %v226, %v228
    %v230 = vrot.slane %v216, %v229
    %233 = vst.msk [vmem:[#allocation2 + $0x2] sm:$0x1] %vm150, %v223
    %234 = vst.msk [vmem:[#allocation2 + $0xa] sm:$0x1] %vm150, %v230
    %v235 = vld [vmem:[#allocation2 + $0x3] sm:$0x1]
    %v236 = vld [vmem:[#allocation2 + $0xb] sm:$0x1]
    %v237 = vsel %vm205, 0.8, 0.0
    %v238 = vmul.f32 %v204, 0.95
    %v241 = vrot.slane %v236, 7
    %v242 = vsel %vm117, %v241, %v235
    %v244 = vadd.f32 %v238, %v242
    %v245 = vsub.f32 %v244, %v237
    %vm246 = vcmp.gt.f32.partialorder %v245, 0.8
    %v247 = vsel %vm246, 1, 0
    %v248 = vcvt.s32.f32 %v247
    %v251 = vunpack.c.l.s4 1966171168
    %v252 = vunpack.c.0.s8 %v251
    %v253 = vlaneseq
    %v254 = vshrl.u32 %v253, 7
    %v255 = vsub.s32 %v252, %v254
    %v256 = vrot.slane %v248, %v255
    %v257 = vcombine.high %v256, %v256
    %v259 = vunpack.c.l.s4 1966171168
    %v260 = vunpack.c.0.s8 %v259
    %v261 = vlaneseq
    %v262 = vshrl.u32 %v261, 7
    %v263 = vsub.s32 %v260, %v262
    %v264 = vrot.slane %v256, %v263
    %v266 = vunpack.c.l.s4 1966171168
    %v267 = vunpack.c.0.s8 %v266
    %v268 = vlaneseq
    %v269 = vshrl.u32 %v268, 7
    %v270 = vsub.s32 %v267, %v269
    %v271 = vrot.slane %v257, %v270
    %274 = vst.msk [vmem:[#allocation2 + $0x3] sm:$0x1] %vm150, %v264
    %275 = vst.msk [vmem:[#allocation2 + $0xb] sm:$0x1] %vm150, %v271
    %v276 = vld [vmem:[#allocation2 + $0x4] sm:$0x1]
    %v277 = vld [vmem:[#allocation2 + $0xc] sm:$0x1]
    %v278 = vsel %vm246, 0.8, 0.0
    %v279 = vmul.f32 %v245, 0.95
    %v282 = vrot.slane %v277, 7
    %v283 = vsel %vm117, %v282, %v276
    %v285 = vadd.f32 %v279, %v283
    %v286 = vsub.f32 %v285, %v278
    %vm287 = vcmp.gt.f32.partialorder %v286, 0.8
    %v288 = vsel %vm287, 1, 0
    %v289 = vcvt.s32.f32 %v288
    %v292 = vunpack.c.l.s4 1966171168
    %v293 = vunpack.c.0.s8 %v292
    %v294 = vlaneseq
    %v295 = vshrl.u32 %v294, 7
    %v296 = vsub.s32 %v293, %v295
    %v297 = vrot.slane %v289, %v296
    %v298 = vcombine.high %v297, %v297
    %v300 = vunpack.c.l.s4 1966171168
    %v301 = vunpack.c.0.s8 %v300
    %v302 = vlaneseq
    %v303 = vshrl.u32 %v302, 7
    %v304 = vsub.s32 %v301, %v303
    %v305 = vrot.slane %v297, %v304
    %v307 = vunpack.c.l.s4 1966171168
    %v308 = vunpack.c.0.s8 %v307
    %v309 = vlaneseq
    %v310 = vshrl.u32 %v309, 7
    %v311 = vsub.s32 %v308, %v310
    %v312 = vrot.slane %v298, %v311
    %315 = vst.msk [vmem:[#allocation2 + $0x4] sm:$0x1] %vm150, %v305
    %316 = vst.msk [vmem:[#allocation2 + $0xc] sm:$0x1] %vm150, %v312
    %v317 = vld [vmem:[#allocation2 + $0x5] sm:$0x1]
    %v318 = vld [vmem:[#allocation2 + $0xd] sm:$0x1]
    %v319 = vsel %vm287, 0.8, 0.0
    %v320 = vmul.f32 %v286, 0.95
    %v323 = vrot.slane %v318, 7
    %v324 = vsel %vm117, %v323, %v317
    %v326 = vadd.f32 %v320, %v324
    %v327 = vsub.f32 %v326, %v319
    %vm328 = vcmp.gt.f32.partialorder %v327, 0.8
    %v329 = vsel %vm328, 1, 0
    %v330 = vcvt.s32.f32 %v329
    %v333 = vunpack.c.l.s4 1966171168
    %v334 = vunpack.c.0.s8 %v333
    %v335 = vlaneseq
    %v336 = vshrl.u32 %v335, 7
    %v337 = vsub.s32 %v334, %v336
    %v338 = vrot.slane %v330, %v337
    %v339 = vcombine.high %v338, %v338
    %v341 = vunpack.c.l.s4 1966171168
    %v342 = vunpack.c.0.s8 %v341
    %v343 = vlaneseq
    %v344 = vshrl.u32 %v343, 7
    %v345 = vsub.s32 %v342, %v344
    %v346 = vrot.slane %v338, %v345
    %v348 = vunpack.c.l.s4 1966171168
    %v349 = vunpack.c.0.s8 %v348
    %v350 = vlaneseq
    %v351 = vshrl.u32 %v350, 7
    %v352 = vsub.s32 %v349, %v351
    %v353 = vrot.slane %v339, %v352
    %356 = vst.msk [vmem:[#allocation2 + $0x5] sm:$0x1] %vm150, %v346
    %357 = vst.msk [vmem:[#allocation2 + $0xd] sm:$0x1] %vm150, %v353
    %v358 = vld [vmem:[#allocation2 + $0x6] sm:$0x1]
    %v359 = vld [vmem:[#allocation2 + $0xe] sm:$0x1]
    %v360 = vsel %vm328, 0.8, 0.0
    %v361 = vmul.f32 %v327, 0.95
    %v364 = vrot.slane %v359, 7
    %v365 = vsel %vm117, %v364, %v358
    %v367 = vadd.f32 %v361, %v365
    %v368 = vsub.f32 %v367, %v360
    %vm369 = vcmp.gt.f32.partialorder %v368, 0.8
    %v370 = vsel %vm369, 1, 0
    %v371 = vcvt.s32.f32 %v370
    %v374 = vunpack.c.l.s4 1966171168
    %v375 = vunpack.c.0.s8 %v374
    %v376 = vlaneseq
    %v377 = vshrl.u32 %v376, 7
    %v378 = vsub.s32 %v375, %v377
    %v379 = vrot.slane %v371, %v378
    %v380 = vcombine.high %v379, %v379
    %v382 = vunpack.c.l.s4 1966171168
    %v383 = vunpack.c.0.s8 %v382
    %v384 = vlaneseq
    %v385 = vshrl.u32 %v384, 7
    %v386 = vsub.s32 %v383, %v385
    %v387 = vrot.slane %v379, %v386
    %v389 = vunpack.c.l.s4 1966171168
    %v390 = vunpack.c.0.s8 %v389
    %v391 = vlaneseq
    %v392 = vshrl.u32 %v391, 7
    %v393 = vsub.s32 %v390, %v392
    %v394 = vrot.slane %v380, %v393
    %397 = vst.msk [vmem:[#allocation2 + $0x6] sm:$0x1] %vm150, %v387
    %398 = vst.msk [vmem:[#allocation2 + $0xe] sm:$0x1] %vm150, %v394
    %v399 = vld [vmem:[#allocation2 + $0x7] sm:$0x1]
    %v400 = vld [vmem:[#allocation2 + $0xf] sm:$0x1]
    %v401 = vsel %vm369, 0.8, 0.0
    %v402 = vmul.f32 %v368, 0.95
    %v405 = vrot.slane %v400, 7
    %v406 = vsel %vm117, %v405, %v399
    %v408 = vadd.f32 %v402, %v406
    %v409 = vsub.f32 %v408, %v401
    %vm410 = vcmp.gt.f32.partialorder %v409, 0.8
    %v411 = vsel %vm410, 1, 0
    %v412 = vcvt.s32.f32 %v411
    %v415 = vunpack.c.l.s4 1966171168
    %v416 = vunpack.c.0.s8 %v415
    %v417 = vlaneseq
    %v418 = vshrl.u32 %v417, 7
    %v419 = vsub.s32 %v416, %v418
    %v420 = vrot.slane %v412, %v419
    %v421 = vcombine.high %v420, %v420
    %v423 = vunpack.c.l.s4 1966171168
    %v424 = vunpack.c.0.s8 %v423
    %v425 = vlaneseq
    %v426 = vshrl.u32 %v425, 7
    %v427 = vsub.s32 %v424, %v426
    %v428 = vrot.slane %v420, %v427
    %v430 = vunpack.c.l.s4 1966171168
    %v431 = vunpack.c.0.s8 %v430
    %v432 = vlaneseq
    %v433 = vshrl.u32 %v432, 7
    %v434 = vsub.s32 %v431, %v433
    %v435 = vrot.slane %v421, %v434
    %438 = vst.msk [vmem:[#allocation2 + $0x7] sm:$0x1] %vm150, %v428
    %439 = vst.msk [vmem:[#allocation2 + $0xf] sm:$0x1] %vm150, %v435
    %vm440 = vcmask 254976
    %441 = vst.msk [vmem:[#allocation3] sm:$0x3] %vm440, %v409
    %v442 = vld [vmem:[#allocation2] sm:$0xff]
    %v443 = vld [vmem:[#allocation2 + $0x8] sm:$0xff]
    %v444 = vpack.c.bf16 %v442, %v442
    %v445 = vpack.c.bf16 %v443, %v443
    %vm446 = vcmask 257024
    %447 = vst.msk [vmem:[#allocation4] sm:$0xf] %vm446, %v444
    %448 = vst.msk [vmem:[#allocation4 + $0x4] sm:$0xf] %vm446, %v445
    // Predicated region
    $region14: #{stellate_forward.1} parent=1 // pred_check
      _
    $region15: #{stellate_forward.1} parent=1 // pred_check_branch
      %450 = sbr.rel (0) target = $region17
    $region16: #{stellate_forward.1} parent=1 // pred_region
      %s452 = ssub.s32 128, 128
      %453 = vsyncadd [#allocation5], %s452
      %s454 = sshll.u32 [#allocation4], 4
      %s455 = int_to_ptr.vmem [resolvable:$true] %s454
      %460 = dma.vmem_to_hbm [thread:$0]  %s455, 128, %s2, [#allocation5], 64, 64, 4
    $region17: #{stellate_forward.1} parent=1 // pred_fallthru
      _
    // Predicated region
    $region18: #{stellate_forward.1} parent=1 // pred_check
      _
    $region19: #{stellate_forward.1} parent=1 // pred_check_branch
      %462 = sbr.rel (0) target = $region21
    $region20: #{stellate_forward.1} parent=1 // pred_region
      %463 = dma.done [#allocation5], 128
    $region21: #{stellate_forward.1} parent=1 // pred_fallthru
      _
    %464 = vsyncpa [#allocation5], 1

</llo_original>
